<compile_context>
chip_gen: v5e
topology: v5e:2x2
jax: 0.10.0
libtpu: 0.0.40
codegen_flags: <defaults>
</compile_context>

<pallas_src>
import functools

import jax
import jax.numpy as jnp
from jax.experimental import pallas as pl
from jax.experimental.pallas import tpu as pltpu

N_KERNELS = 5
MUL_FACTOR = 2.0
VMEM_BUDGET_BYTES = 30 << 20  # working-set target; safe on v7x (64 MiB VMEM)


def _working_set_bytes(tm, tn, d, itemsize):
    # 2 double-buffered f32 output tiles + ~5 tile-sized f32 temporaries
    out_and_tmp = 7 * tm * tn * 4
    # double-buffered row/col X tiles + row/col norm tiles
    ins = 2 * (tm + tn) * (d * itemsize + 4)
    return out_and_tmp + ins


def _choose_tiles(n, d, itemsize, budget_bytes=VMEM_BUDGET_BYTES):
    # Prefer the largest row tile tm first: column panels of X are re-DMA'd
    # once per row block, so that traffic ~ (N/tm)*N*D.  Then the largest tn.
    for tm in (1024, 512, 256, 128):
        tm_c = min(n, tm)
        for tn in (1024, 512, 256, 128):
            tn_c = min(n, tn)
            if _working_set_bytes(tm_c, tn_c, d, itemsize) <= budget_bytes:
                return tm_c, tn_c
    return min(n, 128), min(n, 128)


def _rbf_tile_kernel(scale_ref, xr_ref, xc_ref, sqr_ref, sqc_ref, o_ref, *,
                     n_kernels, ratios, use_squaring):
    # One (TM, TN) output tile: rows i-block of X against cols j-block of X.
    # Gram on the MXU, contracting on D for both operands (no explicit .T).
    gram = jax.lax.dot_general(
        xr_ref[...], xc_ref[...],
        dimension_numbers=(((1,), (1,)), ((), ())),
        preferred_element_type=jnp.float32)                     # (TM, TN)

    # Precomputed squared norms: (TM, 1) + (1, TN) broadcast, no in-kernel
    # reduction over D and no per-tile transpose.
    d2 = jnp.maximum(sqr_ref[...] + sqc_ref[...] - 2.0 * gram, 0.0)

    scale = scale_ref[0]                         # -1 / (bw * m_max), SMEM scalar

    if use_squaring:
        # ratios are exactly {1, 2, 4, ..., 2^(n-1)}: one exp, then square.
        e = jnp.exp(d2 * scale)
        acc = e
        p = e
        for _ in range(n_kernels - 1):
            p = p * p                            # e^2, e^4, e^8, ...
            acc = acc + p
    else:
        acc = jnp.zeros_like(d2)
        for r in ratios:                         # static unrolled loop
            acc = acc + jnp.exp(d2 * (scale * float(r)))

    o_ref[...] = acc.astype(o_ref.dtype)


def rbf_pallas(x, n_kernels=N_KERNELS, mul_factor=MUL_FACTOR, bandwidth=None,
               tile_m=None, tile_n=None):
    N, D = x.shape
    itemsize = jnp.dtype(x.dtype).itemsize

    # bandwidth_multipliers = mul_factor ** (arange(n_kernels) - n_kernels // 2)
    multipliers = [float(mul_factor ** (k - n_kernels // 2))
                   for k in range(n_kernels)]
    m_max = max(multipliers)
    ratios = sorted(m_max / m for m in multipliers)   # exponents of the base exp
    use_squaring = all(abs(r - 2.0 ** j) < 1e-9 for j, r in enumerate(ratios))

    x32 = x.astype(jnp.float32)

    # Row squared norms, computed once (O(N*D)), streamed as (N,1) / (1,N).
    sq = jnp.sum(x32 * x32, axis=-1)
    sq_row = sq.reshape(N, 1)
    sq_col = sq.reshape(1, N)

    if bandwidth is None:
        # Closed-form sum_{ij} d2_ij = 2*N*sum||x||^2 - 2*||sum x||^2, evaluated
        # on mean-centered data (translation invariant; avoids cancellation).
        xc = x32 - jnp.mean(x32, axis=0, keepdims=True)
        sum_sq_c = jnp.sum(xc * xc)
        col_sum = jnp.sum(xc, axis=0)
        sum_d2 = 2.0 * N * sum_sq_c - 2.0 * jnp.sum(col_sum * col_sum)
        bw = sum_d2 / float(N * N - N)
    else:
        bw = jnp.asarray(bandwidth, dtype=jnp.float32)
    scale = (-1.0 / (bw * m_max)).astype(jnp.float32).reshape((1,))

    # Tile selection under an explicit VMEM working-set budget (v7x-safe).
    if tile_m is None and tile_n is None:
        tm, tn = _choose_tiles(N, D, itemsize)
    else:
        auto_tm, auto_tn = _choose_tiles(N, D, itemsize)
        tm = auto_tm if tile_m is None else min(N, tile_m)
        tn = auto_tn if tile_n is None else min(N, tile_n)

    # Right-sized VMEM limit: actual estimated need + margin, not a blanket cap.
    est = _working_set_bytes(tm, tn, D, itemsize)
    vmem_limit = int(max(16 << 20, int(est * 1.25) + (2 << 20)))

    grid = (pl.cdiv(N, tm), pl.cdiv(N, tn))

    kernel = functools.partial(
        _rbf_tile_kernel,
        n_kernels=n_kernels,
        ratios=tuple(ratios),
        use_squaring=use_squaring)

    return pl.pallas_call(
        kernel,
        out_shape=jax.ShapeDtypeStruct((N, N), jnp.float32),
        grid=grid,
        in_specs=[
            pl.BlockSpec(memory_space=pltpu.MemorySpace.SMEM),   # scalar scale
            pl.BlockSpec((tm, D), lambda i, j: (i, 0)),          # row tile of X
            pl.BlockSpec((tn, D), lambda i, j: (j, 0)),          # col tile of X
            pl.BlockSpec((tm, 1), lambda i, j: (i, 0)),          # row ||x||^2
            pl.BlockSpec((1, tn), lambda i, j: (0, j)),          # col ||x||^2
        ],
        out_specs=pl.BlockSpec((tm, tn), lambda i, j: (i, j)),
        compiler_params=pltpu.CompilerParams(
            dimension_semantics=("parallel", "parallel"),
            vmem_limit_bytes=vmem_limit,
        ),
    )(scale, x, x, sq_row, sq_col)


def rbf_reference(x, n_kernels=N_KERNELS, mul_factor=MUL_FACTOR):
    # Pure-JAX reference mirroring the PyTorch forward (exact differences).
    x = x.astype(jnp.float32)
    d2 = jnp.sum((x[:, None, :] - x[None, :, :]) ** 2, axis=-1)
    n = x.shape[0]
    bw = jnp.sum(d2) / (n * n - n)
    mults = mul_factor ** (jnp.arange(n_kernels) - n_kernels // 2)
    return jnp.sum(jnp.exp(-d2[None, ...] / (bw * mults)[:, None, None]), axis=0)


if __name__ == "__main__":
    key = jax.random.PRNGKey(0)

    # Small single-block case (block shape == full array dims).
    N1, D1 = 16, 32
    x1 = jax.random.normal(key, (N1, D1), dtype=jnp.float32)
    out1 = jax.block_until_ready(rbf_pallas(x1))
    ref1 = jax.block_until_ready(rbf_reference(x1))
    assert out1.shape == (N1, N1)
    assert jnp.allclose(out1, ref1, atol=1e-4, rtol=1e-4), (
        f"max abs err {jnp.max(jnp.abs(out1 - ref1))}")

    # Tiled case exercising the 2-D parallel grid (grid = (2, 2)).
    N2, D2 = 256, 64
    x2 = jax.random.normal(jax.random.PRNGKey(1), (N2, D2), dtype=jnp.float32)
    out2 = jax.block_until_ready(rbf_pallas(x2, tile_m=128, tile_n=128))
    ref2 = jax.block_until_ready(rbf_reference(x2))
    assert out2.shape == (N2, N2)
    assert jnp.allclose(out2, ref2, atol=1e-4, rtol=1e-4), (
        f"max abs err {jnp.max(jnp.abs(out2 - ref2))}")

    # Non-divisible case exercising masked boundary blocks (grid = (2, 2)).
    N3, D3 = 200, 48
    x3 = jax.random.normal(jax.random.PRNGKey(2), (N3, D3), dtype=jnp.float32)
    out3 = jax.block_until_ready(rbf_pallas(x3, tile_m=128, tile_n=128))
    ref3 = jax.block_until_ready(rbf_reference(x3))
    assert out3.shape == (N3, N3)
    assert jnp.allclose(out3, ref3, atol=1e-4, rtol=1e-4), (
        f"max abs err {jnp.max(jnp.abs(out3 - ref3))}")

    print("KERNEL_OK")
</pallas_src>

<mosaic_0001>
module attributes {stable_mosaic.version = 11 : i64} {
  func.func @_rbf_tile_kernel(%arg0: i32, %arg1: i32, %arg2: memref<1xf32, #tpu.memory_space<smem>>, %arg3: memref<16x32xf32, #tpu.memory_space<vmem>>, %arg4: memref<16x32xf32, #tpu.memory_space<vmem>>, %arg5: memref<16x1xf32, #tpu.memory_space<vmem>>, %arg6: memref<1x16xf32, #tpu.memory_space<vmem>>, %arg7: memref<16x16xf32, #tpu.memory_space<vmem>>) attributes {dimension_semantics = [#tpu.dimension_semantics<parallel>, #tpu.dimension_semantics<parallel>], iteration_bounds = array<i64: 1, 1>, scalar_prefetch = 0 : i64, scratch_operands = 0 : i64, tpu.core_type = #tpu.core_type<tc>, window_params = [{transform_indices = @transform_0, window_bounds = array<i64: 1>}, {transform_indices = @transform_1, window_bounds = array<i64: 16, 32>}, {transform_indices = @transform_2, window_bounds = array<i64: 16, 32>}, {transform_indices = @transform_3, window_bounds = array<i64: 16, 1>}, {transform_indices = @transform_4, window_bounds = array<i64: 1, 16>}, {transform_indices = @transform_5, window_bounds = array<i64: 16, 16>}]} {
    %c0 = arith.constant 0 : index
    %c0_0 = arith.constant 0 : index
    %0 = vector.load %arg3[%c0, %c0_0] : memref<16x32xf32, #tpu.memory_space<vmem>>, vector<16x32xf32>
    %c0_1 = arith.constant 0 : index
    %c0_2 = arith.constant 0 : index
    %1 = vector.load %arg4[%c0_1, %c0_2] : memref<16x32xf32, #tpu.memory_space<vmem>>, vector<16x32xf32>
    %cst = arith.constant dense<0.000000e+00> : vector<16x16xf32>
    %2 = tpu.matmul %0, %1, %cst {dimension_numbers = #tpu.dot_dimension_numbers<[1], [1], [0], [0], [0, 0, 1, 0], [], []>} : vector<16x32xf32>, vector<16x32xf32>, vector<16x16xf32> -> vector<16x16xf32>
    %c0_3 = arith.constant 0 : index
    %c0_4 = arith.constant 0 : index
    %3 = vector.load %arg5[%c0_3, %c0_4] : memref<16x1xf32, #tpu.memory_space<vmem>>, vector<16x1xf32>
    %c0_5 = arith.constant 0 : index
    %c0_6 = arith.constant 0 : index
    %4 = vector.load %arg6[%c0_5, %c0_6] : memref<1x16xf32, #tpu.memory_space<vmem>>, vector<1x16xf32>
    %5 = vector.broadcast %3 : vector<16x1xf32> to vector<16x16xf32>
    %6 = vector.broadcast %4 : vector<1x16xf32> to vector<16x16xf32>
    %7 = arith.addf %5, %6 : vector<16x16xf32>
    %cst_7 = arith.constant 2.000000e+00 : f32
    %8 = vector.broadcast %cst_7 : f32 to vector<16x16xf32>
    %9 = arith.mulf %8, %2 : vector<16x16xf32>
    %10 = arith.subf %7, %9 : vector<16x16xf32>
    %cst_8 = arith.constant 0.000000e+00 : f32
    %11 = vector.broadcast %cst_8 : f32 to vector<16x16xf32>
    %12 = arith.maximumf %10, %11 : vector<16x16xf32>
    %c0_9 = arith.constant 0 : index
    %13 = memref.load %arg2[%c0_9] : memref<1xf32, #tpu.memory_space<smem>>
    %14 = vector.broadcast %13 : f32 to vector<16x16xf32>
    %15 = arith.mulf %12, %14 : vector<16x16xf32>
    %16 = math.exp %15 : vector<16x16xf32>
    %17 = arith.mulf %16, %16 : vector<16x16xf32>
    %18 = arith.addf %16, %17 : vector<16x16xf32>
    %19 = arith.mulf %17, %17 : vector<16x16xf32>
    %20 = arith.addf %18, %19 : vector<16x16xf32>
    %21 = arith.mulf %19, %19 : vector<16x16xf32>
    %22 = arith.addf %20, %21 : vector<16x16xf32>
    %23 = arith.mulf %21, %21 : vector<16x16xf32>
    %24 = arith.addf %22, %23 : vector<16x16xf32>
    %c0_10 = arith.constant 0 : index
    %c0_11 = arith.constant 0 : index
    %25 = vector.load %arg7[%c0_10, %c0_11] : memref<16x16xf32, #tpu.memory_space<vmem>>, vector<16x16xf32>
    tpu.vector_store %arg7[%c0_10, %c0_11], %24 {strides = array<i32>} : memref<16x16xf32, #tpu.memory_space<vmem>>, vector<16x16xf32>,
    return
  }
  func.func @transform_0(%arg0: i32, %arg1: i32) -> i32 {
    %c0_i32 = arith.constant 0 : i32
    %c0_i32_0 = arith.constant 0 : i32
    return %c0_i32 : i32
  }
  func.func @transform_1(%arg0: i32, %arg1: i32) -> (i32, i32) {
    %c0_i32 = arith.constant 0 : i32
    %c0_i32_0 = arith.constant 0 : i32
    return %arg0, %c0_i32 : i32, i32
  }
  func.func @transform_2(%arg0: i32, %arg1: i32) -> (i32, i32) {
    %c0_i32 = arith.constant 0 : i32
    %c0_i32_0 = arith.constant 0 : i32
    return %arg1, %c0_i32 : i32, i32
  }
  func.func @transform_3(%arg0: i32, %arg1: i32) -> (i32, i32) {
    %c0_i32 = arith.constant 0 : i32
    %c0_i32_0 = arith.constant 0 : i32
    return %arg0, %c0_i32 : i32, i32
  }
  func.func @transform_4(%arg0: i32, %arg1: i32) -> (i32, i32) {
    %c0_i32 = arith.constant 0 : i32
    %c0_i32_0 = arith.constant 0 : i32
    return %c0_i32, %arg1 : i32, i32
  }
  func.func @transform_5(%arg0: i32, %arg1: i32) -> (i32, i32) {
    %c0_i32 = arith.constant 0 : i32
    return %arg0, %arg1 : i32, i32
  }
}

</mosaic_0001>

<llo_original>
// kernel: tpu_custom_call.1
$region0: #{tpu_custom_call.1}
  #allocation0 [shape = 'u32[]', space=smem, size = 0x4, offset = 0x4, fixed_abs, tag = 'smem constant byte address 0x4 - core index']
  #allocation1 [shape = 'u32[72,128]{1,0:T(1,128)}', space=vmem, size = 0x9000, scoped, tag = 'internal scratch']
  #allocation2 [shape = 'f32[1]{0:T(128)S(6)}', space=smem, size = 0x200, scoped, tag = 'scoped memory for tpu_custom_call.1']
  %s0 = inlined_call_operand.<no memory space> [shape: f32[1], index: 0, kind: input, shape index: {}]
  %s1 = inlined_call_operand.vmem [shape: f32[16,32], index: 1, kind: input, shape index: {}]
  %s2 = inlined_call_operand.hbm [shape: f32[16,32], index: 2, kind: input, shape index: {}]
  %s3 = inlined_call_operand.vmem [shape: f32[16,1], index: 3, kind: input, shape index: {}]
  %s4 = inlined_call_operand.vmem [shape: f32[1,16], index: 4, kind: input, shape index: {}]
  %s5 = inlined_call_operand.hbm [shape: f32[16,16], index: 5, kind: output, shape index: {}]
  %s6 = sld [smem:[#allocation0]]
  $region34: #{tpu_custom_call.1} parent=0
    _
  %s8 = ssub.s32 1, %s6
  %s9 = scalar_select 0, %s8, %s6
  %10 = sst [smem:[#allocation2]] %s0
  $region1: #{tpu_custom_call.1} parent=0
    #allocation3 [shape = 'u8[8192]{0}', space=vmem, size = 0x2000, scoped, tag = 'input window, operand 2, single buffered']
    #allocation4 [shape = 's32[1]{0}', space=sflag, size = 0x4, scoped, tag = 'scoped memory for tpu_custom_call.1']
    #allocation5 [shape = 's32[1]{0}', space=sflag, size = 0x4, scoped, tag = 'scoped memory for tpu_custom_call.1']
    #allocation6 [shape = 'u8[8192]{0}', space=vmem, size = 0x2000, scoped, tag = 'output window, operand 0, single buffered']
    %11 = vsyncpa [#allocation4], 0
    %12 = vsyncpa [#allocation5], 0
    // Predicated region
    $region2: #{tpu_custom_call.1} parent=1 // pred_check
      _
    $region3: #{tpu_custom_call.1} parent=1 // pred_check_branch
      %14 = sbr.rel (0) target = $region5
    $region4: #{tpu_custom_call.1} parent=1 // pred_region
      _
    $region5: #{tpu_custom_call.1} parent=1 // pred_fallthru
      _
    // Predicated region
    $region6: #{tpu_custom_call.1} parent=1 // pred_check
      _
    $region7: #{tpu_custom_call.1} parent=1 // pred_check_branch
      %16 = sbr.rel (0) target = $region9
    $region8: #{tpu_custom_call.1} parent=1 // pred_region
      _
    $region9: #{tpu_custom_call.1} parent=1 // pred_fallthru
      _
    // Predicated region
    $region10: #{tpu_custom_call.1} parent=1 // pred_check
      _
    $region11: #{tpu_custom_call.1} parent=1 // pred_check_branch
      %18 = sbr.rel (0) target = $region13
    $region12: #{tpu_custom_call.1} parent=1 // pred_region
      %20 = vsyncadd [#allocation4], 0
      %s21 = sshll.u32 %s2, 4
      %s22 = int_to_ptr.hbm [resolvable:$true] %s21
      %s23 = sshll.u32 [#allocation3], 4
      %s24 = int_to_ptr.vmem [resolvable:$true] %s23
      %29 = dma.hbm_to_vmem [thread:$0]  %s22, 256, %s24, [#allocation4], 128, 128, 8
    $region13: #{tpu_custom_call.1} parent=1 // pred_fallthru
      _
    // Predicated region
    $region14: #{tpu_custom_call.1} parent=1 // pred_check
      _
    $region15: #{tpu_custom_call.1} parent=1 // pred_check_branch
      %31 = sbr.rel (0) target = $region17
    $region16: #{tpu_custom_call.1} parent=1 // pred_region
      _
    $region17: #{tpu_custom_call.1} parent=1 // pred_fallthru
      _
    // Predicated region
    $region18: #{tpu_custom_call.1} parent=1 // pred_check
      _
    $region19: #{tpu_custom_call.1} parent=1 // pred_check_branch
      %33 = sbr.rel (0) target = $region21
    $region20: #{tpu_custom_call.1} parent=1 // pred_region
      _
    $region21: #{tpu_custom_call.1} parent=1 // pred_fallthru
      _
    // Predicated region
    $region22: #{tpu_custom_call.1} parent=1 // pred_check
      _
    $region23: #{tpu_custom_call.1} parent=1 // pred_check_branch
      %35 = sbr.rel (0) target = $region25
    $region24: #{tpu_custom_call.1} parent=1 // pred_region
      %37 = dma.done [#allocation4], 256
    $region25: #{tpu_custom_call.1} parent=1 // pred_fallthru
      _
    %v38 = vld [vmem:[%s1] sm:$0xff]
    %v39 = vld [vmem:[%s1 + $0x8] sm:$0xff]
    %v40 = vld [vmem:[#allocation3] sm:$0xff]
    %v41 = vld [vmem:[#allocation3 + $0x8] sm:$0xff]
    %vm42 = vcmask 261120
    %v44 = vsel %vm42, %v38, 0
    %v47 = vsel %vm42, %v39, 0
    %v50 = vsel %vm42, %v40, 0
    %v53 = vsel %vm42, %v41, 0
    %55 = vmatpush.xpose.msra.mxu0 0.0
    %56 = vmatpush.xpose.msra.mxu0 0.0
    %57 = vmatpush.xpose.msra.mxu0 0.0
    %58 = vmatpush.xpose.msra.mxu0 0.0
    %59 = vmatpush.xpose.msra.mxu0 0.0
    %60 = vmatpush.xpose.msra.mxu0 0.0
    %61 = vmatpush.xpose.msra.mxu0 0.0
    %62 = vmatpush.xpose.msra.mxu0 0.0
    %63 = vmatpush.xpose.msra.mxu0 0.0
    %64 = vmatpush.xpose.msra.mxu0 0.0
    %65 = vmatpush.xpose.msra.mxu0 0.0
    %66 = vmatpush.xpose.msra.mxu0 0.0
    %67 = vmatpush.xpose.msra.mxu0 0.0
    %68 = vmatpush.xpose.msra.mxu0 0.0
    %69 = vmatpush.xpose.msra.mxu0 %v53
    %70 = vmatpush.xpose.msra.mxu0 %v50
    %71 = vmatmul.f32.gmra.mxu0 %v44
    %v72 = vpop.f32.mrf.mxu0
    %v73 = vadd.f32 0.0, %v72
    %74 = vmatmul.f32.gmra.mxu0 %v47
    %v75 = vpop.f32.mrf.mxu0
    %v76 = vadd.f32 0.0, %v75
    %77 = vdwg.mxu0
    %v78 = vld [vmem:[%s3] sm:$0xff]
    %v79 = vld [vmem:[%s3 + $0x8] sm:$0xff]
    %v80 = vld [vmem:[%s4] sm:$0x1]
    %82 = vset.pattern.permute.xlu0 0
    %83 = vperm.xlu0 %82, %v78
    %v84 = vpop.permute.xlu0 %83
    %87 = vset.pattern.permute.xlu0 0
    %88 = vperm.xlu0 %87, %v79
    %v89 = vpop.permute.xlu0 %88
    %v92 = vperm.slane %v80, 0
    %v94 = vadd.f32 %v84, %v92
    %v95 = vadd.f32 %v89, %v92
    %v96 = vmul.f32 %v73, 2.0
    %v97 = vmul.f32 %v76, 2.0
    %v98 = vsub.f32 %v94, %v96
    %v99 = vsub.f32 %v95, %v97
    %v100 = vmax.f32 %v98, 0.0
    %v101 = vmax.f32 %v99, 0.0
    %s102 = sld [smem:[#allocation2]]
    %v103 = vstv %s102
    %v104 = vmul.f32 %v100, %v103
    %v105 = vmul.f32 %v101, %v103
    %v106 = vmul.f32 %v104, 1.442695
    %v107 = vpow.pop %v106
    %v108 = vmul.f32 %v105, 1.442695
    %v109 = vpow.pop %v108
    %v110 = vmul.f32 %v107, %v107
    %v111 = vmul.f32 %v109, %v109
    %v112 = vadd.f32 %v107, %v110
    %v113 = vadd.f32 %v109, %v111
    %v114 = vmul.f32 %v110, %v110
    %v115 = vmul.f32 %v111, %v111
    %v116 = vadd.f32 %v112, %v114
    %v117 = vadd.f32 %v113, %v115
    %v118 = vmul.f32 %v114, %v114
    %v119 = vmul.f32 %v115, %v115
    %v120 = vadd.f32 %v116, %v118
    %v121 = vadd.f32 %v117, %v119
    %v122 = vmul.f32 %v118, %v118
    %v123 = vmul.f32 %v119, %v119
    %v124 = vadd.f32 %v120, %v122
    %v125 = vadd.f32 %v121, %v123
    %vm126 = vcmask 130048
    %127 = vst.msk [vmem:[#allocation6] sm:$0xff] %vm126, %v124
    %128 = vst.msk [vmem:[#allocation6 + $0x8] sm:$0xff] %vm126, %v125
    // Predicated region
    $region26: #{tpu_custom_call.1} parent=1 // pred_check
      _
    $region27: #{tpu_custom_call.1} parent=1 // pred_check_branch
      %130 = sbr.rel (0) target = $region29
    $region28: #{tpu_custom_call.1} parent=1 // pred_region
      %132 = vsyncadd [#allocation5], 0
      %s133 = sshll.u32 [#allocation6], 4
      %s134 = int_to_ptr.vmem [resolvable:$true] %s133
      %s135 = sshll.u32 %s5, 4
      %s136 = int_to_ptr.hbm [resolvable:$true] %s135
      %141 = dma.vmem_to_hbm [thread:$0]  %s134, 256, %s136, [#allocation5], 128, 128, 8
    $region29: #{tpu_custom_call.1} parent=1 // pred_fallthru
      _
    // Predicated region
    $region30: #{tpu_custom_call.1} parent=1 // pred_check
      _
    $region31: #{tpu_custom_call.1} parent=1 // pred_check_branch
      %143 = sbr.rel (0) target = $region33
    $region32: #{tpu_custom_call.1} parent=1 // pred_region
      %145 = dma.done [#allocation5], 256
    $region33: #{tpu_custom_call.1} parent=1 // pred_fallthru
      _
    %146 = vsyncpa [#allocation4], 1
    %147 = vsyncpa [#allocation5], 1

</llo_original>
